<compile_context>
chip_gen: v5e
topology: v5e:2x2
jax: 0.10.0
libtpu: 0.0.40
codegen_flags: <defaults>
</compile_context>

<pallas_src>
import jax
import jax.numpy as jnp
from jax.experimental import pallas as pl
from jax.experimental.pallas import tpu as pltpu

LATENT_DIM = (32, 32, 32, 1)     # default latent_dim=[32, 32, 32, 1]
NUM_NODE_FEATS = 8
OUTPUT_DIM = 16
NUM_EDGE_FEATS = 0


def attpool_kernel(adj_ref, invdeg_ref, feat_ref,
                   w_ref, b_ref, wo_ref, bo_ref,
                   out_ref):
    # Per-graph block (grid step g):
    #   adj_ref    : [1, MAXN, MAXN] bf16   (A + I) of this graph, 0 on padded rows/cols
    #   invdeg_ref : [1, MAXN, 1]    f32    1/(deg+1) for real nodes, 0 on padded rows
    #   feat_ref   : [1, MAXN, D]    f32    node features, zero-padded to D lanes
    #   w_ref      : [L, D, D]              packed conv weights (zero-padded)
    #   b_ref      : [L, 1, D]              packed conv biases  (zero-padded)
    #   wo_ref     : [L, D, OUT]            packed output-projection slices
    #   bo_ref     : [1, OUT]
    adj = adj_ref[0].astype(jnp.float32)        # [MAXN, MAXN]
    invdeg = invdeg_ref[0]                      # [MAXN, 1]
    h = feat_ref[0]                             # [MAXN, D]

    num_layers = w_ref.shape[0]
    node_acc = jnp.zeros((h.shape[0], out_ref.shape[-1]), jnp.float32)

    for lv in range(num_layers):
        # (A + I) @ h  ==  adj @ h + h   (identity folded host-side)
        n2npool = jnp.dot(adj, h, preferred_element_type=jnp.float32)
        lin = jnp.dot(n2npool, w_ref[lv],
                      preferred_element_type=jnp.float32) + b_ref[lv]
        # multiply by precomputed reciprocal; padded rows (invdeg == 0) stay exactly 0
        h = jnp.tanh(lin * invdeg)                                   # [MAXN, D]
        # concat(h_lv) @ W_out  ==  sum_lv h_lv @ W_out[lv-slice], accumulated per node
        node_acc = node_acc + jnp.dot(h, wo_ref[lv],
                                      preferred_element_type=jnp.float32)

    # Sum pooling over this graph's nodes (padded rows contribute exact zeros).
    pooled = jnp.sum(node_acc, axis=0, keepdims=True)                # [1, OUT]
    out = jnp.maximum(pooled + bo_ref[...], 0.0)                     # relu(relu(x)) == relu(x)
    out_ref[...] = out.reshape(out_ref.shape)


def attpool_forward(adj_blocks, invdeg_blocks, feat_blocks,
                    wpack, bpack, wopack, bout):
    num_graphs, maxn, _ = adj_blocks.shape
    num_layers, d, _ = wpack.shape
    out_dim = bout.shape[-1]

    out = pl.pallas_call(
        attpool_kernel,
        out_shape=jax.ShapeDtypeStruct((num_graphs, 1, out_dim), jnp.float32),
        grid=(num_graphs,),
        in_specs=[
            pl.BlockSpec((1, maxn, maxn), lambda g: (g, 0, 0)),   # adjacency block
            pl.BlockSpec((1, maxn, 1), lambda g: (g, 0, 0)),      # 1/(deg+1) (+mask)
            pl.BlockSpec((1, maxn, d), lambda g: (g, 0, 0)),      # node features
            pl.BlockSpec((num_layers, d, d), lambda g: (0, 0, 0)),        # conv W
            pl.BlockSpec((num_layers, 1, d), lambda g: (0, 0, 0)),        # conv b
            pl.BlockSpec((num_layers, d, out_dim), lambda g: (0, 0, 0)),  # out-proj slices
            pl.BlockSpec((1, out_dim), lambda g: (0, 0)),                 # out-proj bias
        ],
        out_specs=pl.BlockSpec((1, 1, out_dim), lambda g: (g, 0, 0)),
        compiler_params=pltpu.CompilerParams(
            dimension_semantics=("parallel",),        # one graph per core on v7x megacore
            vmem_limit_bytes=48 * 1024 * 1024,        # explicit budget (fits v7x's 64 MiB)
        ),
    )(adj_blocks, invdeg_blocks, feat_blocks, wpack, bpack, wopack, bout)
    return out[:, 0, :]


def ref_forward(adj, degs, node_feat, layer_params, seg, wout, bout):
    """Pure-JAX reference mirroring the PyTorch module (sum-pool stand-in)."""
    h = node_feat
    cats = []
    for w, b in layer_params:
        n2npool = adj @ h + h
        h = jnp.tanh((n2npool @ w + b) / degs)
        cats.append(h)
    cur = jnp.concatenate(cats, axis=1)          # [N, total_latent_dim]
    pooled = seg @ cur                           # per-graph sum pooling
    out = jnp.maximum(pooled @ wout + bout, 0.0)
    return jnp.maximum(out, 0.0)


if __name__ == "__main__":
    # --- deterministic synthetic graphs: 2 ring graphs of sizes 7 and 9 ------
    graph_sizes = [7, 9]
    n_nodes = sum(graph_sizes)
    n_graphs = len(graph_sizes)
    num_layers = len(LATENT_DIM)
    D = max(NUM_NODE_FEATS, max(LATENT_DIM))                 # uniform padded width (32)
    MAXN = ((max(graph_sizes) + 7) // 8) * 8                 # per-graph node padding (16)

    # Global (unpadded) operators for the reference.
    adj_rows = [[0.0] * n_nodes for _ in range(n_nodes)]
    seg_rows = [[0.0] * n_nodes for _ in range(n_graphs)]
    offset = 0
    for g, sz in enumerate(graph_sizes):
        for i in range(sz):
            j = (i + 1) % sz
            adj_rows[offset + i][offset + j] = 1.0
            adj_rows[offset + j][offset + i] = 1.0
            seg_rows[g][offset + i] = 1.0
        offset += sz
    adj_global = jnp.array(adj_rows, jnp.float32)                    # [N, N]
    degs = jnp.sum(adj_global, axis=1, keepdims=True) + 1.0          # [N, 1]
    seg = jnp.array(seg_rows, jnp.float32)                           # [G, N]

    # Per-graph padded blocks for the kernel: (A + I) in bf16, inv(deg+1) with
    # zeros on padded rows (doubles as the node mask).
    adj_blocks_list, invdeg_list = [], []
    for sz in graph_sizes:
        block = [[0.0] * MAXN for _ in range(MAXN)]
        for i in range(sz):
            j = (i + 1) % sz
            block[i][j] = 1.0
            block[j][i] = 1.0
        deg = [sum(row) for row in block]
        for i in range(sz):
            block[i][i] += 1.0                                       # fold A + I
        invdeg = [[1.0 / (deg[i] + 1.0)] if i < sz else [0.0] for i in range(MAXN)]
        adj_blocks_list.append(block)
        invdeg_list.append(invdeg)
    adj_blocks = jnp.array(adj_blocks_list, jnp.float32).astype(jnp.bfloat16)
    invdeg_blocks = jnp.array(invdeg_list, jnp.float32)

    # --- deterministic parameters (shapes from __init__) ---------------------
    key = jax.random.PRNGKey(0)
    dims = [NUM_NODE_FEATS] + list(LATENT_DIM)
    layer_params = []
    for lv in range(num_layers):
        key, kw, kb = jax.random.split(key, 3)
        w = 0.1 * jax.random.normal(kw, (dims[lv], dims[lv + 1]), jnp.float32)
        b = 0.1 * jax.random.normal(kb, (1, dims[lv + 1]), jnp.float32)
        layer_params.append((w, b))

    total_latent = sum(LATENT_DIM)                                   # 97
    key, kwo, kbo, kx = jax.random.split(key, 4)
    wout = 0.1 * jax.random.normal(kwo, (total_latent, OUTPUT_DIM), jnp.float32)
    bout = 0.1 * jax.random.normal(kbo, (1, OUTPUT_DIM), jnp.float32)
    node_feat = jax.random.normal(kx, (n_nodes, NUM_NODE_FEATS), jnp.float32)

    # Pack node features and parameters into uniform, zero-padded slabs.
    feat_blocks = jnp.zeros((n_graphs, MAXN, D), jnp.float32)
    offset = 0
    for g, sz in enumerate(graph_sizes):
        feat_blocks = feat_blocks.at[g, :sz, :NUM_NODE_FEATS].set(
            node_feat[offset:offset + sz])
        offset += sz

    wpack = jnp.zeros((num_layers, D, D), jnp.float32)
    bpack = jnp.zeros((num_layers, 1, D), jnp.float32)
    wopack = jnp.zeros((num_layers, D, OUTPUT_DIM), jnp.float32)
    s = 0
    for lv, (w, b) in enumerate(layer_params):
        din, dout = w.shape
        wpack = wpack.at[lv, :din, :dout].set(w)
        bpack = bpack.at[lv, :, :dout].set(b)
        wopack = wopack.at[lv, :dout, :].set(wout[s:s + dout])
        s += dout

    # --- run kernel and check against pure-JAX reference ---------------------
    out = attpool_forward(adj_blocks, invdeg_blocks, feat_blocks,
                          wpack, bpack, wopack, bout)
    out = jax.block_until_ready(out)

    ref = ref_forward(adj_global, degs, node_feat, layer_params, seg, wout, bout)
    assert out.shape == (n_graphs, OUTPUT_DIM)
    assert jnp.allclose(out, ref, atol=1e-4, rtol=1e-4), (out, ref)

    print("KERNEL_OK")
</pallas_src>

<mosaic_0001>
module attributes {stable_mosaic.version = 11 : i64} {
  func.func @attpool_kernel(%arg0: i32, %arg1: memref<1x16x16xbf16, #tpu.memory_space<vmem>>, %arg2: memref<1x16x1xf32, #tpu.memory_space<vmem>>, %arg3: memref<1x16x32xf32, #tpu.memory_space<vmem>>, %arg4: memref<4x32x32xf32, #tpu.memory_space<vmem>>, %arg5: memref<4x1x32xf32, #tpu.memory_space<vmem>>, %arg6: memref<4x32x16xf32, #tpu.memory_space<vmem>>, %arg7: memref<1x16xf32, #tpu.memory_space<vmem>>, %arg8: memref<1x1x16xf32, #tpu.memory_space<vmem>>) attributes {dimension_semantics = [#tpu.dimension_semantics<parallel>], iteration_bounds = array<i64: 2>, scalar_prefetch = 0 : i64, scratch_operands = 0 : i64, tpu.core_type = #tpu.core_type<tc>, window_params = [{transform_indices = @transform_0, window_bounds = array<i64: 1, 16, 16>}, {transform_indices = @transform_1, window_bounds = array<i64: 1, 16, 1>}, {transform_indices = @transform_2, window_bounds = array<i64: 1, 16, 32>}, {pipeline_mode = #tpu.pipeline_mode<synchronous>, transform_indices = @transform_3, window_bounds = array<i64: 4, 32, 32>}, {pipeline_mode = #tpu.pipeline_mode<synchronous>, transform_indices = @transform_4, window_bounds = array<i64: 4, 1, 32>}, {pipeline_mode = #tpu.pipeline_mode<synchronous>, transform_indices = @transform_5, window_bounds = array<i64: 4, 32, 16>}, {pipeline_mode = #tpu.pipeline_mode<synchronous>, transform_indices = @transform_6, window_bounds = array<i64: 1, 16>}, {transform_indices = @transform_7, window_bounds = array<i64: 1, 1, 16>}]} {
    %c0 = arith.constant 0 : index
    %c0_0 = arith.constant 0 : index
    %c0_1 = arith.constant 0 : index
    %0 = vector.load %arg1[%c0, %c0_0, %c0_1] : memref<1x16x16xbf16, #tpu.memory_space<vmem>>, vector<1x16x16xbf16>
    %1 = vector.shape_cast %0 : vector<1x16x16xbf16> to vector<16x16xbf16>
    %2 = arith.extf %1 : vector<16x16xbf16> to vector<16x16xf32>
    %c0_2 = arith.constant 0 : index
    %c0_3 = arith.constant 0 : index
    %c0_4 = arith.constant 0 : index
    %3 = vector.load %arg2[%c0_2, %c0_3, %c0_4] : memref<1x16x1xf32, #tpu.memory_space<vmem>>, vector<1x16x1xf32>
    %4 = vector.shape_cast %3 : vector<1x16x1xf32> to vector<16x1xf32>
    %c0_5 = arith.constant 0 : index
    %c0_6 = arith.constant 0 : index
    %c0_7 = arith.constant 0 : index
    %5 = vector.load %arg3[%c0_5, %c0_6, %c0_7] : memref<1x16x32xf32, #tpu.memory_space<vmem>>, vector<1x16x32xf32>
    %6 = vector.shape_cast %5 : vector<1x16x32xf32> to vector<16x32xf32>
    %cst = arith.constant 0.000000e+00 : f32
    %7 = vector.broadcast %cst : f32 to vector<16x16xf32>
    %cst_8 = arith.constant dense<0.000000e+00> : vector<16x32xf32>
    %8 = tpu.matmul %2, %6, %cst_8 {dimension_numbers = #tpu.dot_dimension_numbers<[1], [0], [0], [1], [0, 0, 1, 1], [], []>} : vector<16x16xf32>, vector<16x32xf32>, vector<16x32xf32> -> vector<16x32xf32>
    %c0_9 = arith.constant 0 : index
    %c0_10 = arith.constant 0 : index
    %c0_11 = arith.constant 0 : index
    %9 = vector.load %arg4[%c0_9, %c0_10, %c0_11] : memref<4x32x32xf32, #tpu.memory_space<vmem>>, vector<1x32x32xf32>
    %10 = vector.shape_cast %9 : vector<1x32x32xf32> to vector<32x32xf32>
    %cst_12 = arith.constant dense<0.000000e+00> : vector<16x32xf32>
    %11 = tpu.matmul %8, %10, %cst_12 {dimension_numbers = #tpu.dot_dimension_numbers<[1], [0], [0], [1], [0, 0, 1, 1], [], []>} : vector<16x32xf32>, vector<32x32xf32>, vector<16x32xf32> -> vector<16x32xf32>
    %c0_13 = arith.constant 0 : index
    %c0_14 = arith.constant 0 : index
    %c0_15 = arith.constant 0 : index
    %12 = vector.load %arg5[%c0_13, %c0_14, %c0_15] : memref<4x1x32xf32, #tpu.memory_space<vmem>>, vector<1x1x32xf32>
    %13 = vector.shape_cast %12 : vector<1x1x32xf32> to vector<1x32xf32>
    %14 = vector.broadcast %13 : vector<1x32xf32> to vector<16x32xf32>
    %15 = arith.addf %11, %14 : vector<16x32xf32>
    %16 = vector.broadcast %4 : vector<16x1xf32> to vector<16x32xf32>
    %17 = arith.mulf %15, %16 : vector<16x32xf32>
    %18 = math.tanh %17 : vector<16x32xf32>
    %c0_16 = arith.constant 0 : index
    %c0_17 = arith.constant 0 : index
    %c0_18 = arith.constant 0 : index
    %19 = vector.load %arg6[%c0_16, %c0_17, %c0_18] : memref<4x32x16xf32, #tpu.memory_space<vmem>>, vector<1x32x16xf32>
    %20 = vector.shape_cast %19 : vector<1x32x16xf32> to vector<32x16xf32>
    %cst_19 = arith.constant dense<0.000000e+00> : vector<16x16xf32>
    %21 = tpu.matmul %18, %20, %cst_19 {dimension_numbers = #tpu.dot_dimension_numbers<[1], [0], [0], [1], [0, 0, 1, 1], [], []>} : vector<16x32xf32>, vector<32x16xf32>, vector<16x16xf32> -> vector<16x16xf32>
    %22 = arith.addf %7, %21 : vector<16x16xf32>
    %cst_20 = arith.constant dense<0.000000e+00> : vector<16x32xf32>
    %23 = tpu.matmul %2, %18, %cst_20 {dimension_numbers = #tpu.dot_dimension_numbers<[1], [0], [0], [1], [0, 0, 1, 1], [], []>} : vector<16x16xf32>, vector<16x32xf32>, vector<16x32xf32> -> vector<16x32xf32>
    %c1 = arith.constant 1 : index
    %c0_21 = arith.constant 0 : index
    %c0_22 = arith.constant 0 : index
    %24 = vector.load %arg4[%c1, %c0_21, %c0_22] : memref<4x32x32xf32, #tpu.memory_space<vmem>>, vector<1x32x32xf32>
    %25 = vector.shape_cast %24 : vector<1x32x32xf32> to vector<32x32xf32>
    %cst_23 = arith.constant dense<0.000000e+00> : vector<16x32xf32>
    %26 = tpu.matmul %23, %25, %cst_23 {dimension_numbers = #tpu.dot_dimension_numbers<[1], [0], [0], [1], [0, 0, 1, 1], [], []>} : vector<16x32xf32>, vector<32x32xf32>, vector<16x32xf32> -> vector<16x32xf32>
    %c1_24 = arith.constant 1 : index
    %c0_25 = arith.constant 0 : index
    %c0_26 = arith.constant 0 : index
    %27 = vector.load %arg5[%c1_24, %c0_25, %c0_26] : memref<4x1x32xf32, #tpu.memory_space<vmem>>, vector<1x1x32xf32>
    %28 = vector.shape_cast %27 : vector<1x1x32xf32> to vector<1x32xf32>
    %29 = vector.broadcast %28 : vector<1x32xf32> to vector<16x32xf32>
    %30 = arith.addf %26, %29 : vector<16x32xf32>
    %31 = vector.broadcast %4 : vector<16x1xf32> to vector<16x32xf32>
    %32 = arith.mulf %30, %31 : vector<16x32xf32>
    %33 = math.tanh %32 : vector<16x32xf32>
    %c1_27 = arith.constant 1 : index
    %c0_28 = arith.constant 0 : index
    %c0_29 = arith.constant 0 : index
    %34 = vector.load %arg6[%c1_27, %c0_28, %c0_29] : memref<4x32x16xf32, #tpu.memory_space<vmem>>, vector<1x32x16xf32>
    %35 = vector.shape_cast %34 : vector<1x32x16xf32> to vector<32x16xf32>
    %cst_30 = arith.constant dense<0.000000e+00> : vector<16x16xf32>
    %36 = tpu.matmul %33, %35, %cst_30 {dimension_numbers = #tpu.dot_dimension_numbers<[1], [0], [0], [1], [0, 0, 1, 1], [], []>} : vector<16x32xf32>, vector<32x16xf32>, vector<16x16xf32> -> vector<16x16xf32>
    %37 = arith.addf %22, %36 : vector<16x16xf32>
    %cst_31 = arith.constant dense<0.000000e+00> : vector<16x32xf32>
    %38 = tpu.matmul %2, %33, %cst_31 {dimension_numbers = #tpu.dot_dimension_numbers<[1], [0], [0], [1], [0, 0, 1, 1], [], []>} : vector<16x16xf32>, vector<16x32xf32>, vector<16x32xf32> -> vector<16x32xf32>
    %c2 = arith.constant 2 : index
    %c0_32 = arith.constant 0 : index
    %c0_33 = arith.constant 0 : index
    %39 = vector.load %arg4[%c2, %c0_32, %c0_33] : memref<4x32x32xf32, #tpu.memory_space<vmem>>, vector<1x32x32xf32>
    %40 = vector.shape_cast %39 : vector<1x32x32xf32> to vector<32x32xf32>
    %cst_34 = arith.constant dense<0.000000e+00> : vector<16x32xf32>
    %41 = tpu.matmul %38, %40, %cst_34 {dimension_numbers = #tpu.dot_dimension_numbers<[1], [0], [0], [1], [0, 0, 1, 1], [], []>} : vector<16x32xf32>, vector<32x32xf32>, vector<16x32xf32> -> vector<16x32xf32>
    %c2_35 = arith.constant 2 : index
    %c0_36 = arith.constant 0 : index
    %c0_37 = arith.constant 0 : index
    %42 = vector.load %arg5[%c2_35, %c0_36, %c0_37] : memref<4x1x32xf32, #tpu.memory_space<vmem>>, vector<1x1x32xf32>
    %43 = vector.shape_cast %42 : vector<1x1x32xf32> to vector<1x32xf32>
    %44 = vector.broadcast %43 : vector<1x32xf32> to vector<16x32xf32>
    %45 = arith.addf %41, %44 : vector<16x32xf32>
    %46 = vector.broadcast %4 : vector<16x1xf32> to vector<16x32xf32>
    %47 = arith.mulf %45, %46 : vector<16x32xf32>
    %48 = math.tanh %47 : vector<16x32xf32>
    %c2_38 = arith.constant 2 : index
    %c0_39 = arith.constant 0 : index
    %c0_40 = arith.constant 0 : index
    %49 = vector.load %arg6[%c2_38, %c0_39, %c0_40] : memref<4x32x16xf32, #tpu.memory_space<vmem>>, vector<1x32x16xf32>
    %50 = vector.shape_cast %49 : vector<1x32x16xf32> to vector<32x16xf32>
    %cst_41 = arith.constant dense<0.000000e+00> : vector<16x16xf32>
    %51 = tpu.matmul %48, %50, %cst_41 {dimension_numbers = #tpu.dot_dimension_numbers<[1], [0], [0], [1], [0, 0, 1, 1], [], []>} : vector<16x32xf32>, vector<32x16xf32>, vector<16x16xf32> -> vector<16x16xf32>
    %52 = arith.addf %37, %51 : vector<16x16xf32>
    %cst_42 = arith.constant dense<0.000000e+00> : vector<16x32xf32>
    %53 = tpu.matmul %2, %48, %cst_42 {dimension_numbers = #tpu.dot_dimension_numbers<[1], [0], [0], [1], [0, 0, 1, 1], [], []>} : vector<16x16xf32>, vector<16x32xf32>, vector<16x32xf32> -> vector<16x32xf32>
    %c3 = arith.constant 3 : index
    %c0_43 = arith.constant 0 : index
    %c0_44 = arith.constant 0 : index
    %54 = vector.load %arg4[%c3, %c0_43, %c0_44] : memref<4x32x32xf32, #tpu.memory_space<vmem>>, vector<1x32x32xf32>
    %55 = vector.shape_cast %54 : vector<1x32x32xf32> to vector<32x32xf32>
    %cst_45 = arith.constant dense<0.000000e+00> : vector<16x32xf32>
    %56 = tpu.matmul %53, %55, %cst_45 {dimension_numbers = #tpu.dot_dimension_numbers<[1], [0], [0], [1], [0, 0, 1, 1], [], []>} : vector<16x32xf32>, vector<32x32xf32>, vector<16x32xf32> -> vector<16x32xf32>
    %c3_46 = arith.constant 3 : index
    %c0_47 = arith.constant 0 : index
    %c0_48 = arith.constant 0 : index
    %57 = vector.load %arg5[%c3_46, %c0_47, %c0_48] : memref<4x1x32xf32, #tpu.memory_space<vmem>>, vector<1x1x32xf32>
    %58 = vector.shape_cast %57 : vector<1x1x32xf32> to vector<1x32xf32>
    %59 = vector.broadcast %58 : vector<1x32xf32> to vector<16x32xf32>
    %60 = arith.addf %56, %59 : vector<16x32xf32>
    %61 = vector.broadcast %4 : vector<16x1xf32> to vector<16x32xf32>
    %62 = arith.mulf %60, %61 : vector<16x32xf32>
    %63 = math.tanh %62 : vector<16x32xf32>
    %c3_49 = arith.constant 3 : index
    %c0_50 = arith.constant 0 : index
    %c0_51 = arith.constant 0 : index
    %64 = vector.load %arg6[%c3_49, %c0_50, %c0_51] : memref<4x32x16xf32, #tpu.memory_space<vmem>>, vector<1x32x16xf32>
    %65 = vector.shape_cast %64 : vector<1x32x16xf32> to vector<32x16xf32>
    %cst_52 = arith.constant dense<0.000000e+00> : vector<16x16xf32>
    %66 = tpu.matmul %63, %65, %cst_52 {dimension_numbers = #tpu.dot_dimension_numbers<[1], [0], [0], [1], [0, 0, 1, 1], [], []>} : vector<16x32xf32>, vector<32x16xf32>, vector<16x16xf32> -> vector<16x16xf32>
    %67 = arith.addf %52, %66 : vector<16x16xf32>
    %cst_53 = arith.constant dense<0.000000e+00> : vector<16xf32>
    %68 = vector.multi_reduction <add>, %67, %cst_53 [0] : vector<16x16xf32> to vector<16xf32>
    %69 = vector.shape_cast %68 : vector<16xf32> to vector<1x16xf32>
    %c0_54 = arith.constant 0 : index
    %c0_55 = arith.constant 0 : index
    %70 = vector.load %arg7[%c0_54, %c0_55] : memref<1x16xf32, #tpu.memory_space<vmem>>, vector<1x16xf32>
    %71 = arith.addf %69, %70 : vector<1x16xf32>
    %cst_56 = arith.constant 0.000000e+00 : f32
    %72 = vector.broadcast %cst_56 : f32 to vector<1x16xf32>
    %73 = arith.maximumf %71, %72 : vector<1x16xf32>
    %74 = vector.shape_cast %73 : vector<1x16xf32> to vector<1x1x16xf32>
    %c0_57 = arith.constant 0 : index
    %c0_58 = arith.constant 0 : index
    %c0_59 = arith.constant 0 : index
    %75 = vector.load %arg8[%c0_57, %c0_58, %c0_59] : memref<1x1x16xf32, #tpu.memory_space<vmem>>, vector<1x1x16xf32>
    tpu.vector_store %arg8[%c0_57, %c0_58, %c0_59], %74 {strides = array<i32>} : memref<1x1x16xf32, #tpu.memory_space<vmem>>, vector<1x1x16xf32>,
    return
  }
  func.func @transform_0(%arg0: i32) -> (i32, i32, i32) {
    %c0_i32 = arith.constant 0 : i32
    %c0_i32_0 = arith.constant 0 : i32
    %c0_i32_1 = arith.constant 0 : i32
    return %arg0, %c0_i32, %c0_i32_0 : i32, i32, i32
  }
  func.func @transform_1(%arg0: i32) -> (i32, i32, i32) {
    %c0_i32 = arith.constant 0 : i32
    %c0_i32_0 = arith.constant 0 : i32
    %c0_i32_1 = arith.constant 0 : i32
    return %arg0, %c0_i32, %c0_i32_0 : i32, i32, i32
  }
  func.func @transform_2(%arg0: i32) -> (i32, i32, i32) {
    %c0_i32 = arith.constant 0 : i32
    %c0_i32_0 = arith.constant 0 : i32
    %c0_i32_1 = arith.constant 0 : i32
    return %arg0, %c0_i32, %c0_i32_0 : i32, i32, i32
  }
  func.func @transform_3(%arg0: i32) -> (i32, i32, i32) {
    %c0_i32 = arith.constant 0 : i32
    %c0_i32_0 = arith.constant 0 : i32
    %c0_i32_1 = arith.constant 0 : i32
    %c0_i32_2 = arith.constant 0 : i32
    return %c0_i32, %c0_i32_0, %c0_i32_1 : i32, i32, i32
  }
  func.func @transform_4(%arg0: i32) -> (i32, i32, i32) {
    %c0_i32 = arith.constant 0 : i32
    %c0_i32_0 = arith.constant 0 : i32
    %c0_i32_1 = arith.constant 0 : i32
    %c0_i32_2 = arith.constant 0 : i32
    return %c0_i32, %c0_i32_0, %c0_i32_1 : i32, i32, i32
  }
  func.func @transform_5(%arg0: i32) -> (i32, i32, i32) {
    %c0_i32 = arith.constant 0 : i32
    %c0_i32_0 = arith.constant 0 : i32
    %c0_i32_1 = arith.constant 0 : i32
    %c0_i32_2 = arith.constant 0 : i32
    return %c0_i32, %c0_i32_0, %c0_i32_1 : i32, i32, i32
  }
  func.func @transform_6(%arg0: i32) -> (i32, i32) {
    %c0_i32 = arith.constant 0 : i32
    %c0_i32_0 = arith.constant 0 : i32
    %c0_i32_1 = arith.constant 0 : i32
    return %c0_i32, %c0_i32_0 : i32, i32
  }
  func.func @transform_7(%arg0: i32) -> (i32, i32, i32) {
    %c0_i32 = arith.constant 0 : i32
    %c0_i32_0 = arith.constant 0 : i32
    %c0_i32_1 = arith.constant 0 : i32
    return %arg0, %c0_i32, %c0_i32_0 : i32, i32, i32
  }
}

</mosaic_0001>

<llo_original>
// kernel: tpu_custom_call.1
$region0: #{tpu_custom_call.1}
  #allocation0 [shape = 'u32[]', space=smem, size = 0x4, offset = 0x4, fixed_abs, tag = 'smem constant byte address 0x4 - core index']
  #allocation1 [shape = 'u32[72,128]{1,0:T(1,128)}', space=vmem, size = 0x9000, scoped, tag = 'internal scratch']
  %s0 = inlined_call_operand.vmem [shape: bf16[2,16,16], index: 0, kind: input, shape index: {}]
  %s1 = inlined_call_operand.vmem [shape: f32[2,16,1], index: 1, kind: input, shape index: {}]
  %s2 = inlined_call_operand.vmem [shape: f32[2,16,32], index: 2, kind: input, shape index: {}]
  %s3 = inlined_call_operand.vmem [shape: f32[4,32,32], index: 3, kind: input, shape index: {}]
  %s4 = inlined_call_operand.vmem [shape: f32[4,1,32], index: 4, kind: input, shape index: {}]
  %s5 = inlined_call_operand.vmem [shape: f32[4,32,16], index: 5, kind: input, shape index: {}]
  %s6 = inlined_call_operand.vmem [shape: f32[1,16], index: 6, kind: input, shape index: {}]
  %s7 = inlined_call_operand.hbm [shape: f32[2,1,16], index: 7, kind: output, shape index: {}]
  %s8 = sld [smem:[#allocation0]]
  $region61: #{tpu_custom_call.1} parent=0
    _
  %s10 = ssub.s32 1, %s8
  %s11 = scalar_select 0, %s10, %s8
  $region1: #{tpu_custom_call.1} parent=0
    #allocation2 [shape = 'u8[1024]{0}', space=vmem, size = 0x400, scoped, tag = 'output window, operand 0']
    #allocation3 [shape = 's32[2]{0}', space=sflag, size = 0x8, scoped, tag = 'scoped memory for tpu_custom_call.1']
    %12 = vsyncpa [#allocation3], 0
    %s13 = scalar_lea.sflag [#allocation3], 1
    %14 = vsyncpa %s13, 0
    loop: start=0, step=1, limit=4
    $region2: #{tpu_custom_call.1} parent=1 // loop_pre_header
      _
    $region3: #{tpu_custom_call.1} parent=1 // loop_header
      %s16 = sphi 0, %s20
      %p17 = scmp.ge.s32.totalorder %s16, 4
      %s26 = sphi 0, %s28
      %s29 = sphi 0, %s26
      %s30 = sphi 0, %s29
      %s46 = sphi 0, %s30
      %s52 = sphi 0, %s54
      %s55 = sphi 0, %s52
      %s56 = sphi 0, %s55
      %s72 = sphi 0, %s56
      %s78 = sphi 0, %s80
      %s81 = sphi 0, %s78
      %s82 = sphi 0, %s81
      %s98 = sphi 0, %s82
      %s102 = sphi 0, %s102
      %s104 = sphi 0, %s102
      %s105 = sphi 0, %s104
      %s119 = sphi 0, %s105
      %s123 = sphi 0, %s123
      %s125 = sphi 0, %s123
      %s126 = sphi 0, %s125
      %s140 = sphi 0, %s126
      %s144 = sphi 0, %s144
      %s146 = sphi 0, %s144
      %s147 = sphi 0, %s146
      %s161 = sphi 0, %s147
      %s165 = sphi 0, %s165
      %s167 = sphi 0, %s165
      %s168 = sphi 0, %s167
      %s182 = sphi 0, %s168
      %s188 = sphi 0, %s190
      %s191 = sphi 0, %s188
      %s192 = sphi 0, %s191
      %s208 = sphi 0, %s192
    $region4: #{tpu_custom_call.1} parent=1 // loop_header_branch
      %19 = sbr.rel (%p17) target = $region8
    $region5: #{tpu_custom_call.1} parent=1 // loop_body
      %s21 = ssub.s32 %s16, 1
      %s22 = ssub.s32 %s16, 2
      %s23 = sadd.s32 %s16, 1
      %s24 = ssub.s32 %s16, %s23
      %p25 = scmp.eq.s32.totalorder %s24, 0
      %s27 = sadd.s32 %s26, 1
      %s28 = scalar_select %p25, %s26, %s27
      %p31 = pneg %p25
      %p32 = scmp.eq.s32.totalorder %s16, 1
      %p33 = por %p31, %p32
      %p34 = scmp.ne.s32.totalorder %s26, %s29
      %p35 = scmp.eq.s32.totalorder %s16, 0
      %p36 = por %p34, %p35
      %p37 = scmp.ne.s32.totalorder %s26, %s29
      %p38 = scmp.eq.s32.totalorder %s21, 1
      %p39 = por %p37, %p38
      %p40 = scmp.ne.s32.totalorder %s29, %s30
      %p41 = scmp.eq.s32.totalorder %s21, 0
      %p42 = por %p40, %p41
      %p43 = scmp.ne.s32.totalorder %s29, %s30
      %p44 = scmp.eq.s32.totalorder %s22, 1
      %p45 = por %p43, %p44
      %p47 = scmp.ne.s32.totalorder %s30, %s46
      %p48 = scmp.eq.s32.totalorder %s22, 0
      %p49 = por %p47, %p48
      %s50 = ssub.s32 %s16, %s23
      %p51 = scmp.eq.s32.totalorder %s50, 0
      %s53 = sadd.s32 %s52, 1
      %s54 = scalar_select %p51, %s52, %s53
      %p57 = pneg %p51
      %p58 = scmp.eq.s32.totalorder %s16, 1
      %p59 = por %p57, %p58
      %p60 = scmp.ne.s32.totalorder %s52, %s55
      %p61 = scmp.eq.s32.totalorder %s16, 0
      %p62 = por %p60, %p61
      %p63 = scmp.ne.s32.totalorder %s52, %s55
      %p64 = scmp.eq.s32.totalorder %s21, 1
      %p65 = por %p63, %p64
      %p66 = scmp.ne.s32.totalorder %s55, %s56
      %p67 = scmp.eq.s32.totalorder %s21, 0
      %p68 = por %p66, %p67
      %p69 = scmp.ne.s32.totalorder %s55, %s56
      %p70 = scmp.eq.s32.totalorder %s22, 1
      %p71 = por %p69, %p70
      %p73 = scmp.ne.s32.totalorder %s56, %s72
      %p74 = scmp.eq.s32.totalorder %s22, 0
      %p75 = por %p73, %p74
      %s76 = ssub.s32 %s16, %s23
      %p77 = scmp.eq.s32.totalorder %s76, 0
      %s79 = sadd.s32 %s78, 1
      %s80 = scalar_select %p77, %s78, %s79
      %p83 = pneg %p77
      %p84 = scmp.eq.s32.totalorder %s16, 1
      %p85 = por %p83, %p84
      %p86 = scmp.ne.s32.totalorder %s78, %s81
      %p87 = scmp.eq.s32.totalorder %s16, 0
      %p88 = por %p86, %p87
      %p89 = scmp.ne.s32.totalorder %s78, %s81
      %p90 = scmp.eq.s32.totalorder %s21, 1
      %p91 = por %p89, %p90
      %p92 = scmp.ne.s32.totalorder %s81, %s82
      %p93 = scmp.eq.s32.totalorder %s21, 0
      %p94 = por %p92, %p93
      %p95 = scmp.ne.s32.totalorder %s81, %s82
      %p96 = scmp.eq.s32.totalorder %s22, 1
      %p97 = por %p95, %p96
      %p99 = scmp.ne.s32.totalorder %s82, %s98
      %p100 = scmp.eq.s32.totalorder %s22, 0
      %p101 = por %p99, %p100
      %s103 = sadd.s32 %s102, 1
      %p106 = scmp.eq.s32.totalorder %s16, 1
      %p107 = scmp.ne.s32.totalorder %s102, %s104
      %p108 = scmp.eq.s32.totalorder %s16, 0
      %p109 = por %p107, %p108
      %p110 = scmp.ne.s32.totalorder %s102, %s104
      %p111 = scmp.eq.s32.totalorder %s21, 1
      %p112 = por %p110, %p111
      %p113 = scmp.ne.s32.totalorder %s104, %s105
      %p114 = scmp.eq.s32.totalorder %s21, 0
      %p115 = por %p113, %p114
      %p116 = scmp.ne.s32.totalorder %s104, %s105
      %p117 = scmp.eq.s32.totalorder %s22, 1
      %p118 = por %p116, %p117
      %p120 = scmp.ne.s32.totalorder %s105, %s119
      %p121 = scmp.eq.s32.totalorder %s22, 0
      %p122 = por %p120, %p121
      %s124 = sadd.s32 %s123, 1
      %p127 = scmp.eq.s32.totalorder %s16, 1
      %p128 = scmp.ne.s32.totalorder %s123, %s125
      %p129 = scmp.eq.s32.totalorder %s16, 0
      %p130 = por %p128, %p129
      %p131 = scmp.ne.s32.totalorder %s123, %s125
      %p132 = scmp.eq.s32.totalorder %s21, 1
      %p133 = por %p131, %p132
      %p134 = scmp.ne.s32.totalorder %s125, %s126
      %p135 = scmp.eq.s32.totalorder %s21, 0
      %p136 = por %p134, %p135
      %p137 = scmp.ne.s32.totalorder %s125, %s126
      %p138 = scmp.eq.s32.totalorder %s22, 1
      %p139 = por %p137, %p138
      %p141 = scmp.ne.s32.totalorder %s126, %s140
      %p142 = scmp.eq.s32.totalorder %s22, 0
      %p143 = por %p141, %p142
      %s145 = sadd.s32 %s144, 1
      %p148 = scmp.eq.s32.totalorder %s16, 1
      %p149 = scmp.ne.s32.totalorder %s144, %s146
      %p150 = scmp.eq.s32.totalorder %s16, 0
      %p151 = por %p149, %p150
      %p152 = scmp.ne.s32.totalorder %s144, %s146
      %p153 = scmp.eq.s32.totalorder %s21, 1
      %p154 = por %p152, %p153
      %p155 = scmp.ne.s32.totalorder %s146, %s147
      %p156 = scmp.eq.s32.totalorder %s21, 0
      %p157 = por %p155, %p156
      %p158 = scmp.ne.s32.totalorder %s146, %s147
      %p159 = scmp.eq.s32.totalorder %s22, 1
      %p160 = por %p158, %p159
      %p162 = scmp.ne.s32.totalorder %s147, %s161
      %p163 = scmp.eq.s32.totalorder %s22, 0
      %p164 = por %p162, %p163
      %s166 = sadd.s32 %s165, 1
      %p169 = scmp.eq.s32.totalorder %s16, 1
      %p170 = scmp.ne.s32.totalorder %s165, %s167
      %p171 = scmp.eq.s32.totalorder %s16, 0
      %p172 = por %p170, %p171
      %p173 = scmp.ne.s32.totalorder %s165, %s167
      %p174 = scmp.eq.s32.totalorder %s21, 1
      %p175 = por %p173, %p174
      %p176 = scmp.ne.s32.totalorder %s167, %s168
      %p177 = scmp.eq.s32.totalorder %s21, 0
      %p178 = por %p176, %p177
      %p179 = scmp.ne.s32.totalorder %s167, %s168
      %p180 = scmp.eq.s32.totalorder %s22, 1
      %p181 = por %p179, %p180
      %p183 = scmp.ne.s32.totalorder %s168, %s182
      %p184 = scmp.eq.s32.totalorder %s22, 0
      %p185 = por %p183, %p184
      %s186 = ssub.s32 %s16, %s23
      %p187 = scmp.eq.s32.totalorder %s186, 0
      %s189 = sadd.s32 %s188, 1
      %s190 = scalar_select %p187, %s188, %s189
      %p193 = pneg %p187
      %p194 = scmp.eq.s32.totalorder %s16, 1
      %p195 = por %p193, %p194
      %p196 = scmp.ne.s32.totalorder %s188, %s191
      %p197 = scmp.eq.s32.totalorder %s16, 0
      %p198 = por %p196, %p197
      %p199 = scmp.ne.s32.totalorder %s188, %s191
      %p200 = scmp.eq.s32.totalorder %s21, 1
      %p201 = por %p199, %p200
      %p202 = scmp.ne.s32.totalorder %s191, %s192
      %p203 = scmp.eq.s32.totalorder %s21, 0
      %p204 = por %p202, %p203
      %p205 = scmp.ne.s32.totalorder %s191, %s192
      %p206 = scmp.eq.s32.totalorder %s22, 1
      %p207 = por %p205, %p206
      %p209 = scmp.ne.s32.totalorder %s192, %s208
      %p210 = scmp.eq.s32.totalorder %s22, 0
      %p211 = por %p209, %p210
      %p212 = scmp.le.s32.totalorder 1, %s16
      %p213 = scmp.lt.s32.totalorder %s16, 3
      %p214 = pnand %p212, %p213
      %p215 = pneg %p214
      // Predicated region
      $region9: #{tpu_custom_call.1} parent=5 // pred_check
        _
      $region10: #{tpu_custom_call.1} parent=5 // pred_check_branch
        %217 = sbr.rel (%p214) target = $region12
      $region11: #{tpu_custom_call.1} parent=5 // pred_region
        %s218 = ssub.s32 %s16, 1
        // Predicated region
        $region13: #{tpu_custom_call.1} parent=11 // pred_check
          %p219 = pneg %p115
        $region14: #{tpu_custom_call.1} parent=11 // pred_check_branch
          %221 = sbr.rel (%p219) target = $region16
        $region15: #{tpu_custom_call.1} parent=11 // pred_region
          _
        $region16: #{tpu_custom_call.1} parent=11 // pred_fallthru
          _
        // Predicated region
        $region17: #{tpu_custom_call.1} parent=11 // pred_check
          %p222 = pneg %p136
        $region18: #{tpu_custom_call.1} parent=11 // pred_check_branch
          %224 = sbr.rel (%p222) target = $region20
        $region19: #{tpu_custom_call.1} parent=11 // pred_region
          _
        $region20: #{tpu_custom_call.1} parent=11 // pred_fallthru
          _
        // Predicated region
        $region21: #{tpu_custom_call.1} parent=11 // pred_check
          %p225 = pneg %p157
        $region22: #{tpu_custom_call.1} parent=11 // pred_check_branch
          %227 = sbr.rel (%p225) target = $region24
        $region23: #{tpu_custom_call.1} parent=11 // pred_region
          _
        $region24: #{tpu_custom_call.1} parent=11 // pred_fallthru
          _
        // Predicated region
        $region25: #{tpu_custom_call.1} parent=11 // pred_check
          %p228 = pneg %p178
        $region26: #{tpu_custom_call.1} parent=11 // pred_check_branch
          %230 = sbr.rel (%p228) target = $region28
        $region27: #{tpu_custom_call.1} parent=11 // pred_region
          _
        $region28: #{tpu_custom_call.1} parent=11 // pred_fallthru
          _
      $region12: #{tpu_custom_call.1} parent=5 // pred_fallthru
        _
      %p231 = scmp.lt.s32.totalorder %s16, 2
      // Predicated region
      $region29: #{tpu_custom_call.1} parent=5 // pred_check
        %p232 = pneg %p231
      $region30: #{tpu_custom_call.1} parent=5 // pred_check_branch
        %234 = sbr.rel (%p232) target = $region32
      $region31: #{tpu_custom_call.1} parent=5 // pred_region
        // Predicated region
        $region33: #{tpu_custom_call.1} parent=31 // pred_check
          %p235 = pneg %p36
        $region34: #{tpu_custom_call.1} parent=31 // pred_check_branch
          %237 = sbr.rel (%p235) target = $region36
        $region35: #{tpu_custom_call.1} parent=31 // pred_region
          %p238 = scmp.lt.s32.totalorder %s16, 1
          %s239 = scalar_select %p238, %s16, 1
          %s240 = smul.addr %s239, 2
          %s241 = smul.addr %s240, 4
          %s242 = scalar_lea.vmem %s0, %s241
        $region36: #{tpu_custom_call.1} parent=31 // pred_fallthru
          _
        // Predicated region
        $region37: #{tpu_custom_call.1} parent=31 // pred_check
          %p243 = pneg %p62
        $region38: #{tpu_custom_call.1} parent=31 // pred_check_branch
          %245 = sbr.rel (%p243) target = $region40
        $region39: #{tpu_custom_call.1} parent=31 // pred_region
          %p246 = scmp.lt.s32.totalorder %s16, 1
          %s247 = scalar_select %p246, %s16, 1
          %s248 = smul.addr %s247, 2
          %s249 = smul.addr %s248, 8
          %s250 = scalar_lea.vmem %s1, %s249
        $region40: #{tpu_custom_call.1} parent=31 // pred_fallthru
          _
        // Predicated region
        $region41: #{tpu_custom_call.1} parent=31 // pred_check
          %p251 = pneg %p88
        $region42: #{tpu_custom_call.1} parent=31 // pred_check_branch
          %253 = sbr.rel (%p251) target = $region44
        $region43: #{tpu_custom_call.1} parent=31 // pred_region
          %p254 = scmp.lt.s32.totalorder %s16, 1
          %s255 = scalar_select %p254, %s16, 1
          %s256 = smul.addr %s255, 2
          %s257 = smul.addr %s256, 8
          %s258 = scalar_lea.vmem %s2, %s257
        $region44: #{tpu_custom_call.1} parent=31 // pred_fallthru
          _
      $region32: #{tpu_custom_call.1} parent=5 // pred_fallthru
        _
      %p259 = scmp.le.s32.totalorder 1, %s16
      %p260 = scmp.lt.s32.totalorder %s16, 3
      %p261 = pnand %p259, %p260
      %p262 = pneg %p261
      // Predicated region
      $region45: #{tpu_custom_call.1} parent=5 // pred_check
        _
      $region46: #{tpu_custom_call.1} parent=5 // pred_check_branch
        %264 = sbr.rel (%p261) target = $region48
      $region47: #{tpu_custom_call.1} parent=5 // pred_region
        %s265 = ssub.s32 %s16, 1
        %p266 = scmp.lt.s32.totalorder %s21, 1
        %s267 = scalar_select %p266, %s21, 1
        %s268 = smul.addr %s267, 2
        %s269 = smul.addr %s268, 4
        %s270 = scalar_lea.vmem %s0, %s269
        %p271 = pneg %p42
        %p272 = pneg %p39
        %p273 = scmp.lt.s32.totalorder %s21, 1
        %s274 = scalar_select %p273, %s21, 1
        %s275 = smul.addr %s274, 2
        %s276 = smul.addr %s275, 8
        %s277 = scalar_lea.vmem %s1, %s276
        %p278 = pneg %p68
        %p279 = pneg %p65
        %p280 = scmp.lt.s32.totalorder %s21, 1
        %s281 = scalar_select %p280, %s21, 1
        %s282 = smul.addr %s281, 2
        %s283 = smul.addr %s282, 8
        %s284 = scalar_lea.vmem %s2, %s283
        %p285 = pneg %p94
        %p286 = pneg %p91
        %p287 = pneg %p115
        %p288 = pneg %p112
        %p289 = pneg %p136
        %p290 = pneg %p133
        %p291 = pneg %p157
        %p292 = pneg %p154
        %p293 = pneg %p178
        %p294 = pneg %p175
        %p295 = pneg %p204
        %p296 = pneg %p201
        %s297 = sand.u32 %s191, 1
        %s298 = scalar_lea.sflag [#allocation3], %s297
        %s299 = sand.u32 %s191, 1
        %s300 = scalar_lea.vmem [#allocation2], %s299
        %p301 = scmp.lt.s32.totalorder %s21, 1
        %s302 = scalar_select %p301, %s21, 1
        %s303 = smul.addr %s302, 2
        %s304 = smul.addr %s303, 4
        %s305 = scalar_lea.vmem %s0, %s304
        %p306 = scmp.lt.s32.totalorder %s21, 1
        %s307 = scalar_select %p306, %s21, 1
        %s308 = smul.addr %s307, 2
        %s309 = smul.addr %s308, 8
        %s310 = scalar_lea.vmem %s1, %s309
        %p311 = scmp.lt.s32.totalorder %s21, 1
        %s312 = scalar_select %p311, %s21, 1
        %s313 = smul.addr %s312, 2
        %s314 = smul.addr %s313, 8
        %s315 = scalar_lea.vmem %s2, %s314
        %v316 = vld [vmem:[%s305] sm:$0xf]
        %v317 = vld [vmem:[%s305 + $0x4] sm:$0xf]
        %v318 = vunpack.c.l.bf16 %v316
        %v319 = vunpack.c.l.bf16 %v317
        %v320 = vld [vmem:[%s310] sm:$0xff]
        %v321 = vld [vmem:[%s310 + $0x8] sm:$0xff]
        %v322 = vld [vmem:[%s315] sm:$0xff]
        %v323 = vld [vmem:[%s315 + $0x8] sm:$0xff]
        %vm324 = vcmask 130048
        %v326 = vsel %vm324, %v318, 0
        %v329 = vsel %vm324, %v319, 0
        %331 = vmatpush.msra.mxu0 0.0
        %332 = vmatpush.msra.mxu0 0.0
        %333 = vmatpush.msra.mxu0 0.0
        %334 = vmatpush.msra.mxu0 0.0
        %335 = vmatpush.msra.mxu0 0.0
        %336 = vmatpush.msra.mxu0 0.0
        %337 = vmatpush.msra.mxu0 0.0
        %338 = vmatpush.msra.mxu0 0.0
        %339 = vmatpush.msra.mxu0 0.0
        %340 = vmatpush.msra.mxu0 0.0
        %341 = vmatpush.msra.mxu0 0.0
        %342 = vmatpush.msra.mxu0 0.0
        %343 = vmatpush.msra.mxu0 0.0
        %344 = vmatpush.msra.mxu0 0.0
        %345 = vmatpush.msra.mxu0 %v323
        %346 = vmatpush.msra.mxu0 %v322
        %347 = vmatmul.f32.gmra.mxu0 %v326
        %v348 = vpop.f32.mrf.mxu0
        %v349 = vadd.f32 0.0, %v348
        %350 = vmatmul.f32.gmra.mxu0 %v329
        %v351 = vpop.f32.mrf.mxu0
        %v352 = vadd.f32 0.0, %v351
        %353 = vdwg.mxu0
        %v354 = vld [vmem:[%s3] sm:$0xff]
        %v355 = vld [vmem:[%s3 + $0x8] sm:$0xff]
        %v356 = vld [vmem:[%s3 + $0x10] sm:$0xff]
        %v357 = vld [vmem:[%s3 + $0x18] sm:$0xff]
        %v358 = vld [vmem:[%s4] sm:$0x1]
        %v360 = vperm.slane %v358, 0
        %vm362 = vcmask 261120
        %v364 = vsel %vm362, %v349, 0
        %v367 = vsel %vm362, %v352, 0
        %369 = vmatpush.msra.mxu0 0.0
        %370 = vmatpush.msra.mxu0 0.0
        %371 = vmatpush.msra.mxu0 0.0
        %372 = vmatpush.msra.mxu0 0.0
        %373 = vmatpush.msra.mxu0 0.0
        %374 = vmatpush.msra.mxu0 0.0
        %375 = vmatpush.msra.mxu0 0.0
        %376 = vmatpush.msra.mxu0 0.0
        %377 = vmatpush.msra.mxu0 0.0
        %378 = vmatpush.msra.mxu0 0.0
        %379 = vmatpush.msra.mxu0 0.0
        %380 = vmatpush.msra.mxu0 0.0
        %381 = vmatpush.msra.mxu0 %v357
        %382 = vmatpush.msra.mxu0 %v356
        %383 = vmatpush.msra.mxu0 %v355
        %384 = vmatpush.msra.mxu0 %v354
        %385 = vmatmul.f32.gmra.mxu0 %v364
        %v386 = vpop.f32.mrf.mxu0
        %v387 = vadd.f32 %v360, %v386
        %388 = vmatmul.f32.gmra.mxu0 %v367
        %v389 = vpop.f32.mrf.mxu0
        %v390 = vadd.f32 %v360, %v389
        %391 = vdwg.mxu0
        %393 = vset.pattern.permute.xlu0 0
        %394 = vperm.xlu0 %393, %v320
        %v395 = vpop.permute.xlu0 %394
        %398 = vset.pattern.permute.xlu0 0
        %399 = vperm.xlu0 %398, %v321
        %v400 = vpop.permute.xlu0 %399
        %v402 = vmul.f32 %v387, %v395
        %v403 = vmul.f32 %v390, %v400
        %v404 = vtanh.pop %v402
        %v405 = vtanh.pop %v403
        %v406 = vld [vmem:[%s5] sm:$0xff]
        %v407 = vld [vmem:[%s5 + $0x8] sm:$0xff]
        %v408 = vld [vmem:[%s5 + $0x10] sm:$0xff]
        %v409 = vld [vmem:[%s5 + $0x18] sm:$0xff]
        %410 = vmatpush.msra.mxu0 0.0
        %411 = vmatpush.msra.mxu0 0.0
        %412 = vmatpush.msra.mxu0 0.0
        %413 = vmatpush.msra.mxu0 0.0
        %414 = vmatpush.msra.mxu0 0.0
        %415 = vmatpush.msra.mxu0 0.0
        %416 = vmatpush.msra.mxu0 0.0
        %417 = vmatpush.msra.mxu0 0.0
        %418 = vmatpush.msra.mxu0 0.0
        %419 = vmatpush.msra.mxu0 0.0
        %420 = vmatpush.msra.mxu0 0.0
        %421 = vmatpush.msra.mxu0 0.0
        %422 = vmatpush.msra.mxu0 0.0
        %423 = vmatpush.msra.mxu0 0.0
        %424 = vmatpush.msra.mxu0 %v405
        %425 = vmatpush.msra.mxu0 %v404
        %426 = vmatmul.f32.gmra.mxu0 %v326
        %v427 = vpop.f32.mrf.mxu0
        %v428 = vadd.f32 0.0, %v427
        %429 = vmatmul.f32.gmra.mxu0 %v329
        %v430 = vpop.f32.mrf.mxu0
        %v431 = vadd.f32 0.0, %v430
        %432 = vdwg.mxu0
        %s433 = scalar_lea.vmem %s3, 32
        %v434 = vld [vmem:[%s433] sm:$0xff]
        %v435 = vld [vmem:[%s433 + $0x8] sm:$0xff]
        %v436 = vld [vmem:[%s433 + $0x10] sm:$0xff]
        %v437 = vld [vmem:[%s433 + $0x18] sm:$0xff]
        %s438 = scalar_lea.vmem %s4, 1
        %v439 = vld [vmem:[%s438] sm:$0x1]
        %v441 = vperm.slane %v439, 0
        %v444 = vsel %vm362, %v428, 0
        %v447 = vsel %vm362, %v431, 0
        %449 = vmatpush.msra.mxu0 0.0
        %450 = vmatpush.msra.mxu0 0.0
        %451 = vmatpush.msra.mxu0 0.0
        %452 = vmatpush.msra.mxu0 0.0
        %453 = vmatpush.msra.mxu0 0.0
        %454 = vmatpush.msra.mxu0 0.0
        %455 = vmatpush.msra.mxu0 0.0
        %456 = vmatpush.msra.mxu0 0.0
        %457 = vmatpush.msra.mxu0 0.0
        %458 = vmatpush.msra.mxu0 0.0
        %459 = vmatpush.msra.mxu0 0.0
        %460 = vmatpush.msra.mxu0 0.0
        %461 = vmatpush.msra.mxu0 %v437
        %462 = vmatpush.msra.mxu0 %v436
        %463 = vmatpush.msra.mxu0 %v435
        %464 = vmatpush.msra.mxu0 %v434
        %465 = vmatmul.f32.gmra.mxu0 %v444
        %v466 = vpop.f32.mrf.mxu0
        %v467 = vadd.f32 %v441, %v466
        %468 = vmatmul.f32.gmra.mxu0 %v447
        %v469 = vpop.f32.mrf.mxu0
        %v470 = vadd.f32 %v441, %v469
        %471 = vdwg.mxu0
        %v472 = vmul.f32 %v467, %v395
        %v473 = vmul.f32 %v470, %v400
        %v474 = vtanh.pop %v472
        %v475 = vtanh.pop %v473
        %s476 = scalar_lea.vmem %s5, 32
        %v477 = vld [vmem:[%s476] sm:$0xff]
        %v478 = vld [vmem:[%s476 + $0x8] sm:$0xff]
        %v479 = vld [vmem:[%s476 + $0x10] sm:$0xff]
        %v480 = vld [vmem:[%s476 + $0x18] sm:$0xff]
        %v482 = vsel %vm362, %v474, 0
        %v485 = vsel %vm362, %v475, 0
        %487 = vmatpush.msra.mxu0 0.0
        %488 = vmatpush.msra.mxu0 0.0
        %489 = vmatpush.msra.mxu0 0.0
        %490 = vmatpush.msra.mxu0 0.0
        %491 = vmatpush.msra.mxu0 0.0
        %492 = vmatpush.msra.mxu0 0.0
        %493 = vmatpush.msra.mxu0 0.0
        %494 = vmatpush.msra.mxu0 0.0
        %495 = vmatpush.msra.mxu0 0.0
        %496 = vmatpush.msra.mxu0 0.0
        %497 = vmatpush.msra.mxu0 0.0
        %498 = vmatpush.msra.mxu0 0.0
        %499 = vmatpush.msra.mxu0 %v480
        %500 = vmatpush.msra.mxu0 %v479
        %501 = vmatpush.msra.mxu0 %v478
        %502 = vmatpush.msra.mxu0 %v477
        %503 = vmatmul.f32.gmra.mxu0 %v482
        %v504 = vpop.f32.mrf.mxu0
        %v505 = vadd.f32 0.0, %v504
        %506 = vmatmul.f32.gmra.mxu0 %v485
        %v507 = vpop.f32.mrf.mxu0
        %v508 = vadd.f32 0.0, %v507
        %509 = vdwg.mxu0
        %v511 = vsel %vm362, %v404, 0
        %v514 = vsel %vm362, %v405, 0
        %516 = vmatpush.msra.mxu0 0.0
        %517 = vmatpush.msra.mxu0 0.0
        %518 = vmatpush.msra.mxu0 0.0
        %519 = vmatpush.msra.mxu0 0.0
        %520 = vmatpush.msra.mxu0 0.0
        %521 = vmatpush.msra.mxu0 0.0
        %522 = vmatpush.msra.mxu0 0.0
        %523 = vmatpush.msra.mxu0 0.0
        %524 = vmatpush.msra.mxu0 0.0
        %525 = vmatpush.msra.mxu0 0.0
        %526 = vmatpush.msra.mxu0 0.0
        %527 = vmatpush.msra.mxu0 0.0
        %528 = vmatpush.msra.mxu0 %v409
        %529 = vmatpush.msra.mxu0 %v408
        %530 = vmatpush.msra.mxu0 %v407
        %531 = vmatpush.msra.mxu0 %v406
        %532 = vmatmul.f32.gmra.mxu0 %v511
        %v533 = vpop.f32.mrf.mxu0
        %v534 = vadd.f32 %v505, %v533
        %535 = vmatmul.f32.gmra.mxu0 %v514
        %v536 = vpop.f32.mrf.mxu0
        %v537 = vadd.f32 %v508, %v536
        %538 = vdwg.mxu0
        %539 = vmatpush.msra.mxu0 0.0
        %540 = vmatpush.msra.mxu0 0.0
        %541 = vmatpush.msra.mxu0 0.0
        %542 = vmatpush.msra.mxu0 0.0
        %543 = vmatpush.msra.mxu0 0.0
        %544 = vmatpush.msra.mxu0 0.0
        %545 = vmatpush.msra.mxu0 0.0
        %546 = vmatpush.msra.mxu0 0.0
        %547 = vmatpush.msra.mxu0 0.0
        %548 = vmatpush.msra.mxu0 0.0
        %549 = vmatpush.msra.mxu0 0.0
        %550 = vmatpush.msra.mxu0 0.0
        %551 = vmatpush.msra.mxu0 0.0
        %552 = vmatpush.msra.mxu0 0.0
        %553 = vmatpush.msra.mxu0 %v475
        %554 = vmatpush.msra.mxu0 %v474
        %555 = vmatmul.f32.gmra.mxu0 %v326
        %v556 = vpop.f32.mrf.mxu0
        %v557 = vadd.f32 0.0, %v556
        %558 = vmatmul.f32.gmra.mxu0 %v329
        %v559 = vpop.f32.mrf.mxu0
        %v560 = vadd.f32 0.0, %v559
        %561 = vdwg.mxu0
        %s562 = scalar_lea.vmem %s3, 64
        %v563 = vld [vmem:[%s562] sm:$0xff]
        %v564 = vld [vmem:[%s562 + $0x8] sm:$0xff]
        %v565 = vld [vmem:[%s562 + $0x10] sm:$0xff]
        %v566 = vld [vmem:[%s562 + $0x18] sm:$0xff]
        %s567 = scalar_lea.vmem %s4, 2
        %v568 = vld [vmem:[%s567] sm:$0x1]
        %v570 = vperm.slane %v568, 0
        %v573 = vsel %vm362, %v557, 0
        %v576 = vsel %vm362, %v560, 0
        %578 = vmatpush.msra.mxu0 0.0
        %579 = vmatpush.msra.mxu0 0.0
        %580 = vmatpush.msra.mxu0 0.0
        %581 = vmatpush.msra.mxu0 0.0
        %582 = vmatpush.msra.mxu0 0.0
        %583 = vmatpush.msra.mxu0 0.0
        %584 = vmatpush.msra.mxu0 0.0
        %585 = vmatpush.msra.mxu0 0.0
        %586 = vmatpush.msra.mxu0 0.0
        %587 = vmatpush.msra.mxu0 0.0
        %588 = vmatpush.msra.mxu0 0.0
        %589 = vmatpush.msra.mxu0 0.0
        %590 = vmatpush.msra.mxu0 %v566
        %591 = vmatpush.msra.mxu0 %v565
        %592 = vmatpush.msra.mxu0 %v564
        %593 = vmatpush.msra.mxu0 %v563
        %594 = vmatmul.f32.gmra.mxu0 %v573
        %v595 = vpop.f32.mrf.mxu0
        %v596 = vadd.f32 %v570, %v595
        %597 = vmatmul.f32.gmra.mxu0 %v576
        %v598 = vpop.f32.mrf.mxu0
        %v599 = vadd.f32 %v570, %v598
        %600 = vdwg.mxu0
        %v601 = vmul.f32 %v596, %v395
        %v602 = vmul.f32 %v599, %v400
        %v603 = vtanh.pop %v601
        %v604 = vtanh.pop %v602
        %s605 = scalar_lea.vmem %s5, 64
        %v606 = vld [vmem:[%s605] sm:$0xff]
        %v607 = vld [vmem:[%s605 + $0x8] sm:$0xff]
        %v608 = vld [vmem:[%s605 + $0x10] sm:$0xff]
        %v609 = vld [vmem:[%s605 + $0x18] sm:$0xff]
        %v611 = vsel %vm362, %v603, 0
        %v614 = vsel %vm362, %v604, 0
        %616 = vmatpush.msra.mxu0 0.0
        %617 = vmatpush.msra.mxu0 0.0
        %618 = vmatpush.msra.mxu0 0.0
        %619 = vmatpush.msra.mxu0 0.0
        %620 = vmatpush.msra.mxu0 0.0
        %621 = vmatpush.msra.mxu0 0.0
        %622 = vmatpush.msra.mxu0 0.0
        %623 = vmatpush.msra.mxu0 0.0
        %624 = vmatpush.msra.mxu0 0.0
        %625 = vmatpush.msra.mxu0 0.0
        %626 = vmatpush.msra.mxu0 0.0
        %627 = vmatpush.msra.mxu0 0.0
        %628 = vmatpush.msra.mxu0 %v609
        %629 = vmatpush.msra.mxu0 %v608
        %630 = vmatpush.msra.mxu0 %v607
        %631 = vmatpush.msra.mxu0 %v606
        %632 = vmatmul.f32.gmra.mxu0 %v611
        %v633 = vpop.f32.mrf.mxu0
        %v634 = vadd.f32 0.0, %v633
        %635 = vmatmul.f32.gmra.mxu0 %v614
        %v636 = vpop.f32.mrf.mxu0
        %v637 = vadd.f32 0.0, %v636
        %638 = vdwg.mxu0
        %v639 = vadd.f32 %v534, %v634
        %v640 = vadd.f32 %v537, %v637
        %641 = vmatpush.msra.mxu0 0.0
        %642 = vmatpush.msra.mxu0 0.0
        %643 = vmatpush.msra.mxu0 0.0
        %644 = vmatpush.msra.mxu0 0.0
        %645 = vmatpush.msra.mxu0 0.0
        %646 = vmatpush.msra.mxu0 0.0
        %647 = vmatpush.msra.mxu0 0.0
        %648 = vmatpush.msra.mxu0 0.0
        %649 = vmatpush.msra.mxu0 0.0
        %650 = vmatpush.msra.mxu0 0.0
        %651 = vmatpush.msra.mxu0 0.0
        %652 = vmatpush.msra.mxu0 0.0
        %653 = vmatpush.msra.mxu0 0.0
        %654 = vmatpush.msra.mxu0 0.0
        %655 = vmatpush.msra.mxu0 %v604
        %656 = vmatpush.msra.mxu0 %v603
        %657 = vmatmul.f32.gmra.mxu0 %v326
        %v658 = vpop.f32.mrf.mxu0
        %v659 = vadd.f32 0.0, %v658
        %660 = vmatmul.f32.gmra.mxu0 %v329
        %v661 = vpop.f32.mrf.mxu0
        %v662 = vadd.f32 0.0, %v661
        %663 = vdwg.mxu0
        %s664 = scalar_lea.vmem %s3, 96
        %v665 = vld [vmem:[%s664] sm:$0xff]
        %v666 = vld [vmem:[%s664 + $0x8] sm:$0xff]
        %v667 = vld [vmem:[%s664 + $0x10] sm:$0xff]
        %v668 = vld [vmem:[%s664 + $0x18] sm:$0xff]
        %s669 = scalar_lea.vmem %s4, 3
        %v670 = vld [vmem:[%s669] sm:$0x1]
        %v672 = vperm.slane %v670, 0
        %v675 = vsel %vm362, %v659, 0
        %v678 = vsel %vm362, %v662, 0
        %680 = vmatpush.msra.mxu0 0.0
        %681 = vmatpush.msra.mxu0 0.0
        %682 = vmatpush.msra.mxu0 0.0
        %683 = vmatpush.msra.mxu0 0.0
        %684 = vmatpush.msra.mxu0 0.0
        %685 = vmatpush.msra.mxu0 0.0
        %686 = vmatpush.msra.mxu0 0.0
        %687 = vmatpush.msra.mxu0 0.0
        %688 = vmatpush.msra.mxu0 0.0
        %689 = vmatpush.msra.mxu0 0.0
        %690 = vmatpush.msra.mxu0 0.0
        %691 = vmatpush.msra.mxu0 0.0
        %692 = vmatpush.msra.mxu0 %v668
        %693 = vmatpush.msra.mxu0 %v667
        %694 = vmatpush.msra.mxu0 %v666
        %695 = vmatpush.msra.mxu0 %v665
        %696 = vmatmul.f32.gmra.mxu0 %v675
        %v697 = vpop.f32.mrf.mxu0
        %v698 = vadd.f32 %v672, %v697
        %699 = vmatmul.f32.gmra.mxu0 %v678
        %v700 = vpop.f32.mrf.mxu0
        %v701 = vadd.f32 %v672, %v700
        %702 = vdwg.mxu0
        %v703 = vmul.f32 %v698, %v395
        %v704 = vmul.f32 %v701, %v400
        %v705 = vtanh.pop %v703
        %v706 = vtanh.pop %v704
        %s707 = scalar_lea.vmem %s5, 96
        %v708 = vld [vmem:[%s707] sm:$0xff]
        %v709 = vld [vmem:[%s707 + $0x8] sm:$0xff]
        %v710 = vld [vmem:[%s707 + $0x10] sm:$0xff]
        %v711 = vld [vmem:[%s707 + $0x18] sm:$0xff]
        %v713 = vsel %vm362, %v705, 0
        %v716 = vsel %vm362, %v706, 0
        %718 = vmatpush.msra.mxu0 0.0
        %719 = vmatpush.msra.mxu0 0.0
        %720 = vmatpush.msra.mxu0 0.0
        %721 = vmatpush.msra.mxu0 0.0
        %722 = vmatpush.msra.mxu0 0.0
        %723 = vmatpush.msra.mxu0 0.0
        %724 = vmatpush.msra.mxu0 0.0
        %725 = vmatpush.msra.mxu0 0.0
        %726 = vmatpush.msra.mxu0 0.0
        %727 = vmatpush.msra.mxu0 0.0
        %728 = vmatpush.msra.mxu0 0.0
        %729 = vmatpush.msra.mxu0 0.0
        %730 = vmatpush.msra.mxu0 %v711
        %731 = vmatpush.msra.mxu0 %v710
        %732 = vmatpush.msra.mxu0 %v709
        %733 = vmatpush.msra.mxu0 %v708
        %734 = vmatmul.f32.gmra.mxu0 %v713
        %v735 = vpop.f32.mrf.mxu0
        %v736 = vadd.f32 0.0, %v735
        %737 = vmatmul.f32.gmra.mxu0 %v716
        %v738 = vpop.f32.mrf.mxu0
        %v739 = vadd.f32 0.0, %v738
        %740 = vdwg.mxu0
        %v741 = vadd.f32 %v639, %v736
        %v742 = vadd.f32 %v640, %v739
        %v743 = vsel %vm324, %v741, 0.0
        %v744 = vsel %vm324, %v742, 0.0
        %v745 = vadd.f32 %v743, %v744
        %v746 = vrot.slane %v745, 4
        %v747 = vadd.f32 %v745, %v746
        %v748 = vrot.slane %v747, 2
        %v749 = vadd.f32 %v747, %v748
        %v750 = vrot.slane %v749, 1
        %v751 = vadd.f32 %v749, %v750
        %v752 = vld [vmem:[%s6] sm:$0x1]
        %v753 = vadd.f32 %v751, %v752
        %v754 = vmax.f32 %v753, 0.0
        %vm755 = vcmask 122880
        %756 = vst.msk [vmem:[%s300] sm:$0x1] %vm755, %v754
        %s757 = sand.u32 %s191, 1
        %s758 = scalar_lea.sflag [#allocation3], %s757
        %s759 = sand.u32 %s191, 1
        %s760 = scalar_lea.vmem [#allocation2], %s759
        // Predicated region
        $region49: #{tpu_custom_call.1} parent=47 // pred_check
          %p761 = pneg %p201
        $region50: #{tpu_custom_call.1} parent=47 // pred_check_branch
          %763 = sbr.rel (%p761) target = $region52
        $region51: #{tpu_custom_call.1} parent=47 // pred_region
          %765 = vsyncadd %s758, 0
          %s766 = scalar_lea.hbm %s7, %s21
          %s768 = sshll.u32 %s760, 4
          %s769 = int_to_ptr.vmem [resolvable:$true] %s768
          %s770 = sshll.u32 %s766, 4
          %s771 = int_to_ptr.hbm [resolvable:$true] %s770
          %773 = dma.vmem_to_hbm [thread:$0]  %s769, 16, %s771, %s758
        $region52: #{tpu_custom_call.1} parent=47 // pred_fallthru
          _
      $region48: #{tpu_custom_call.1} parent=5 // pred_fallthru
        _
      %p774 = scmp.le.s32.totalorder 2, %s16
      // Predicated region
      $region53: #{tpu_custom_call.1} parent=5 // pred_check
        %p775 = pneg %p774
      $region54: #{tpu_custom_call.1} parent=5 // pred_check_branch
        %777 = sbr.rel (%p775) target = $region56
      $region55: #{tpu_custom_call.1} parent=5 // pred_region
        %s778 = ssub.s32 %s16, 2
        // Predicated region
        $region57: #{tpu_custom_call.1} parent=55 // pred_check
          %p779 = pneg %p207
        $region58: #{tpu_custom_call.1} parent=55 // pred_check_branch
          %781 = sbr.rel (%p779) target = $region60
        $region59: #{tpu_custom_call.1} parent=55 // pred_region
          %s782 = sand.u32 %s192, 1
          %s783 = scalar_lea.sflag [#allocation3], %s782
          %s784 = sand.u32 %s192, 1
          %s785 = scalar_lea.vmem [#allocation2], %s784
          %787 = dma.done %s783, 16
        $region60: #{tpu_custom_call.1} parent=55 // pred_fallthru
          _
      $region56: #{tpu_custom_call.1} parent=5 // pred_fallthru
        _
    $region6: #{tpu_custom_call.1} parent=1 // loop_footer
      %s20 = sadd.s32 1, %s16
    $region7: #{tpu_custom_call.1} parent=1 // loop_footer_branch
      %15 = sbr.rel target = $region3
    $region8: #{tpu_custom_call.1} parent=1 // loop_exit
      _
    %788 = vsyncpa [#allocation3], 1
    %s789 = scalar_lea.sflag [#allocation3], 1
    %790 = vsyncpa %s789, 1

</llo_original>
